<compile_context>
chip_gen: v6e
topology: v6e:2x2x1
jax: 0.10.0
libtpu: 0.0.40
codegen_flags: <defaults>
</compile_context>

<pallas_src>
import jax
import jax.numpy as jnp
from jax.experimental import pallas as pl
from jax.experimental.pallas import tpu as pltpu


_LANE = 128
_SUBLANE = 8
# Target bytes per VMEM tile.  Input + output, each double-buffered, is ~4x
# this value (~8 MiB): safe on v5e's 16 MiB default scoped-VMEM limit and a
# good overhead/bandwidth tradeoff on v6e/v7x.
_TARGET_TILE_BYTES = 2 << 20  # 2 MiB
# Below this total tensor size we don't bother forcing a >=2-step grid.
_MIN_SPLIT_BYTES = 256 << 10


def _cdiv(a, b):
    return -(-a // b)


def _round_up(v, m):
    return _cdiv(v, m) * m


def _select_tile(B, F, itemsize, target_bytes):
    """Pick (tb, tf): sublane-pack-dense rows, lane-dense cols, ~target bytes."""
    pack = max(_SUBLANE, 32 // itemsize)   # 8 for f32, 16 for bf16/f16, 32 for int8
    f_pad = _round_up(F, _LANE)

    if B <= pack:
        # Full batch extent (allowed: equals the full array dim).
        tb = B
        tf = (target_bytes // max(1, tb * itemsize)) // _LANE * _LANE
        tf = min(f_pad, max(_LANE, tf))
        return tb, tf

    # 1) lane-dense columns, sized against the minimum (pack-high) tile.
    tf = (target_bytes // (pack * itemsize)) // _LANE * _LANE
    tf = min(f_pad, max(_LANE, tf))

    # 2) grow rows in pack multiples until tile bytes ~ target (bounded by B).
    rows = _cdiv(target_bytes, tf * itemsize)
    rows = _round_up(max(rows, pack), pack)
    tb = min(rows, (B // pack) * pack)

    # 3) keep >= 2 grid steps when there is enough data to split across the
    #    two TensorCores on v7x (prefer splitting along B).
    total_bytes = B * F * itemsize
    if _cdiv(B, tb) * _cdiv(F, tf) < 2 and total_bytes > _MIN_SPLIT_BYTES:
        if tb > pack:
            tb = max(pack, _round_up(_cdiv(B, 2), pack))
        elif tf > _LANE:
            tf = max(_LANE, _round_up(_cdiv(F, 2), _LANE))
    return tb, tf


def _drop_path_kernel(scale_ref, x_ref, o_ref):
    # scale_ref: (TB, 1) f32, per-sample scale: 0.0 (dropped) or 1/keep_prob.
    # x_ref / o_ref: (TB, TF) tile of the flattened (B, F) input / output.
    o_ref[...] = x_ref[...] * scale_ref[...].astype(x_ref.dtype)


def drop_path(x, drop_prob, training, key):
    """Pallas DropPath.  x: (B, ...).  Same shape/dtype out."""
    if (drop_prob is None) or (drop_prob == 0.0) or (not training):
        return x
    if drop_prob >= 1.0:
        # Every path dropped.  (torch's formula divides by keep_prob == 0 and
        # produces NaN; zeros is the well-defined limit.)
        return jnp.zeros_like(x)

    keep_prob = 1.0 - float(drop_prob)
    B = x.shape[0]
    F = 1
    for d in x.shape[1:]:
        F *= d
    x2d = x.reshape(B, F)
    itemsize = x.dtype.itemsize

    # Per-sample keep decision: floor(keep_prob + U[0,1)) == (U >= drop_prob).
    # Precompute the full scale so the kernel is a pure broadcast multiply.
    u = jax.random.uniform(key, (B,), dtype=jnp.float32)
    scale = (u >= jnp.float32(drop_prob)).astype(jnp.float32) * jnp.float32(1.0 / keep_prob)
    scale = scale.reshape(B, 1)

    tb, tf = _select_tile(B, F, itemsize, _TARGET_TILE_BYTES)
    grid = (_cdiv(B, tb), _cdiv(F, tf))

    out2d = pl.pallas_call(
        _drop_path_kernel,
        out_shape=jax.ShapeDtypeStruct((B, F), x.dtype),
        grid_spec=pltpu.PrefetchScalarGridSpec(
            num_scalar_prefetch=0,
            grid=grid,
            in_specs=[
                pl.BlockSpec((tb, 1), lambda i, j: (i, 0)),    # per-sample scale
                pl.BlockSpec((tb, tf), lambda i, j: (i, j)),   # x tile
            ],
            out_specs=pl.BlockSpec((tb, tf), lambda i, j: (i, j)),
        ),
        compiler_params=pltpu.CompilerParams(
            dimension_semantics=("parallel", "parallel")),
        cost_estimate=pl.CostEstimate(
            flops=B * F,
            transcendentals=0,
            bytes_accessed=2 * B * F * itemsize + B * 4),
    )(scale, x2d)

    return out2d.reshape(x.shape)


class DropPath:
    """JAX/Pallas mirror of the PyTorch DropPath module."""

    def __init__(self, drop_prob=None):
        self.drop_prob = drop_prob
        self.training = True

    def __call__(self, x, key):
        return drop_path(x, self.drop_prob, self.training, key)


if __name__ == "__main__":
    key = jax.random.PRNGKey(0)
    kx, kmask, kx2, kmask2 = jax.random.split(key, 4)

    # --- test 1: small f32 input, matches the module's (B, C, H, W) layout.
    B, C, H, W = 2, 4, 16, 16                     # F = 1024
    x = jax.random.normal(kx, (B, C, H, W), dtype=jnp.float32)

    module = DropPath(drop_prob=0.25)
    module.training = True
    out = jax.block_until_ready(module(x, kmask))

    keep_prob = 1.0 - 0.25
    u = jax.random.uniform(kmask, (B,), dtype=jnp.float32)
    m = (u >= jnp.float32(0.25)).astype(jnp.float32).reshape(B, 1, 1, 1)
    ref = x * (m * jnp.float32(1.0 / keep_prob))
    assert out.shape == x.shape and out.dtype == x.dtype
    assert jnp.allclose(out, ref, atol=1e-6), "mismatch vs reference (f32)"

    # Eval mode must be identity.
    module.training = False
    out_eval = jax.block_until_ready(module(x, kmask))
    assert jnp.array_equal(out_eval, x), "eval mode must be identity"

    # --- test 2: bf16 input with larger batch exercises the grown-tb tiling.
    B2, C2, H2, W2 = 16, 24, 16, 8                # F = 3072
    x2 = jax.random.normal(kx2, (B2, C2, H2, W2), dtype=jnp.bfloat16)
    module.training = True
    out2 = jax.block_until_ready(module(x2, kmask2))

    u2 = jax.random.uniform(kmask2, (B2,), dtype=jnp.float32)
    scale2 = (u2 >= jnp.float32(0.25)).astype(jnp.float32) * jnp.float32(1.0 / keep_prob)
    ref2 = x2 * scale2.reshape(B2, 1, 1, 1).astype(jnp.bfloat16)
    assert out2.shape == x2.shape and out2.dtype == x2.dtype
    assert jnp.allclose(out2.astype(jnp.float32), ref2.astype(jnp.float32),
                        atol=1e-6), "mismatch vs reference (bf16)"

    print("KERNEL_OK")
</pallas_src>

<mosaic_0001>
module attributes {stable_mosaic.version = 11 : i64} {
  func.func @_drop_path_kernel(%arg0: i32, %arg1: i32, %arg2: memref<2x1xf32, #tpu.memory_space<vmem>>, %arg3: memref<2x1024xf32, #tpu.memory_space<vmem>>, %arg4: memref<2x1024xf32, #tpu.memory_space<vmem>>) attributes {dimension_semantics = [#tpu.dimension_semantics<parallel>, #tpu.dimension_semantics<parallel>], iteration_bounds = array<i64: 1, 1>, scalar_prefetch = 0 : i64, scratch_operands = 0 : i64, tpu.core_type = #tpu.core_type<tc>, window_params = [{transform_indices = @transform_0, window_bounds = array<i64: 2, 1>}, {transform_indices = @transform_1, window_bounds = array<i64: 2, 1024>}, {transform_indices = @transform_2, window_bounds = array<i64: 2, 1024>}]} {
    %c0 = arith.constant 0 : index
    %c0_0 = arith.constant 0 : index
    %0 = vector.load %arg3[%c0, %c0_0] : memref<2x1024xf32, #tpu.memory_space<vmem>>, vector<2x1024xf32>
    %c0_1 = arith.constant 0 : index
    %c0_2 = arith.constant 0 : index
    %1 = vector.load %arg2[%c0_1, %c0_2] : memref<2x1xf32, #tpu.memory_space<vmem>>, vector<2x1xf32>
    %2 = vector.broadcast %1 : vector<2x1xf32> to vector<2x1024xf32>
    %3 = arith.mulf %0, %2 : vector<2x1024xf32>
    %c0_3 = arith.constant 0 : index
    %c0_4 = arith.constant 0 : index
    %4 = vector.load %arg4[%c0_3, %c0_4] : memref<2x1024xf32, #tpu.memory_space<vmem>>, vector<2x1024xf32>
    tpu.vector_store %arg4[%c0_3, %c0_4], %3 {strides = array<i32>} : memref<2x1024xf32, #tpu.memory_space<vmem>>, vector<2x1024xf32>,
    return
  }
  func.func @transform_0(%arg0: i32, %arg1: i32) -> (i32, i32) {
    %c0_i32 = arith.constant 0 : i32
    %c0_i32_0 = arith.constant 0 : i32
    return %arg0, %c0_i32 : i32, i32
  }
  func.func @transform_1(%arg0: i32, %arg1: i32) -> (i32, i32) {
    %c0_i32 = arith.constant 0 : i32
    return %arg0, %arg1 : i32, i32
  }
  func.func @transform_2(%arg0: i32, %arg1: i32) -> (i32, i32) {
    %c0_i32 = arith.constant 0 : i32
    return %arg0, %arg1 : i32, i32
  }
}

</mosaic_0001>

<llo_original>
// kernel: tpu_custom_call.1
$region0: #{tpu_custom_call.1}
  #allocation0 [shape = 'u32[]', space=smem, size = 0x4, offset = 0x4, fixed_abs, tag = 'smem constant byte address 0x4 - core index']
  #allocation1 [shape = 'u32[144,128]{1,0:T(1,128)}', space=vmem, size = 0x12000, scoped, tag = 'internal scratch']
  %s0 = inlined_call_operand.vmem [shape: f32[2,1], index: 0, kind: input, shape index: {}]
  %s1 = inlined_call_operand.hbm [shape: f32[2,1024], index: 1, kind: input, shape index: {}]
  %s2 = inlined_call_operand.hbm [shape: f32[2,1024], index: 2, kind: output, shape index: {}]
  %s3 = sld [smem:[#allocation0]]
  $region22: #{tpu_custom_call.1} parent=0
    _
  %s5 = ssub.s32 1, %s3
  %s6 = scalar_select 0, %s5, %s3
  $region1: #{tpu_custom_call.1} parent=0
    #allocation2 [shape = 'u8[8192]{0}', space=vmem, size = 0x2000, scoped, tag = 'input window, operand 1, single buffered']
    #allocation3 [shape = 's32[1]{0}', space=sflag, size = 0x4, scoped, tag = 'scoped memory for tpu_custom_call.1']
    #allocation4 [shape = 's32[1]{0}', space=sflag, size = 0x4, scoped, tag = 'scoped memory for tpu_custom_call.1']
    #allocation5 [shape = 'u8[8192]{0}', space=vmem, size = 0x2000, scoped, tag = 'output window, operand 0, single buffered']
    %7 = vsyncpa [#allocation3], 0
    %8 = vsyncpa [#allocation4], 0
    // Predicated region
    $region2: #{tpu_custom_call.1} parent=1 // pred_check
      _
    $region3: #{tpu_custom_call.1} parent=1 // pred_check_branch
      %10 = sbr.rel (0) target = $region5
    $region4: #{tpu_custom_call.1} parent=1 // pred_region
      _
    $region5: #{tpu_custom_call.1} parent=1 // pred_fallthru
      _
    // Predicated region
    $region6: #{tpu_custom_call.1} parent=1 // pred_check
      _
    $region7: #{tpu_custom_call.1} parent=1 // pred_check_branch
      %12 = sbr.rel (0) target = $region9
    $region8: #{tpu_custom_call.1} parent=1 // pred_region
      %s14 = ssub.s32 256, 256
      %15 = vsyncadd [#allocation3], %s14
      %s17 = sshll.u32 [#allocation2], 4
      %s18 = int_to_ptr.vmem [resolvable:$true] %s17
      %20 = dma.hbm_to_vmem [thread:$0]  %s1, 256, %s18, [#allocation3]
    $region9: #{tpu_custom_call.1} parent=1 // pred_fallthru
      _
    // Predicated region
    $region10: #{tpu_custom_call.1} parent=1 // pred_check
      _
    $region11: #{tpu_custom_call.1} parent=1 // pred_check_branch
      %22 = sbr.rel (0) target = $region13
    $region12: #{tpu_custom_call.1} parent=1 // pred_region
      %23 = dma.done [#allocation3], 256
    $region13: #{tpu_custom_call.1} parent=1 // pred_fallthru
      _
    %v24 = vld [vmem:[#allocation2] sm:$0xff]
    %v25 = vld [vmem:[#allocation2 + $0x8] sm:$0xff]
    %v26 = vld [vmem:[%s0] sm:$0x3]
    %28 = vset.pattern.permute.xlu0 0
    %29 = vperm.xlu0 %28, %v26
    %v30 = vpop.permute.xlu0 %29
    %v32 = vunpack.c.l.s4 269488144
    %v33 = vunpack.c.0.s8 %v32
    %v34 = vlaneseq
    %v35 = vshrl.u32 %v34, 7
    %v36 = vsub.s32 %v33, %v35
    %v37 = vrot.slane %v30, %v36
    %v39 = vmul.f32 %v24, %v37
    %v40 = vmul.f32 %v25, %v37
    %41 = vst [vmem:[#allocation5] sm:$0xff] %v39
    %42 = vst [vmem:[#allocation5 + $0x8] sm:$0xff] %v40
    // Predicated region
    $region14: #{tpu_custom_call.1} parent=1 // pred_check
      _
    $region15: #{tpu_custom_call.1} parent=1 // pred_check_branch
      %44 = sbr.rel (0) target = $region17
    $region16: #{tpu_custom_call.1} parent=1 // pred_region
      %s46 = ssub.s32 256, 256
      %47 = vsyncadd [#allocation4], %s46
      %s49 = sshll.u32 [#allocation5], 4
      %s50 = int_to_ptr.vmem [resolvable:$true] %s49
      %52 = dma.vmem_to_hbm [thread:$0]  %s50, 256, %s2, [#allocation4]
    $region17: #{tpu_custom_call.1} parent=1 // pred_fallthru
      _
    // Predicated region
    $region18: #{tpu_custom_call.1} parent=1 // pred_check
      _
    $region19: #{tpu_custom_call.1} parent=1 // pred_check_branch
      %54 = sbr.rel (0) target = $region21
    $region20: #{tpu_custom_call.1} parent=1 // pred_region
      %55 = dma.done [#allocation4], 256
    $region21: #{tpu_custom_call.1} parent=1 // pred_fallthru
      _
    %56 = vsyncpa [#allocation3], 1
    %57 = vsyncpa [#allocation4], 1

</llo_original>
